<compile_context>
chip_gen: v6e
topology: v6e:2x2x1
jax: 0.10.0
libtpu: 0.0.40
codegen_flags: <defaults>
</compile_context>

<pallas_src>
import functools

import jax
import jax.numpy as jnp
from jax import lax
from jax.experimental import pallas as pl
from jax.experimental.pallas import tpu as pltpu

EPS = 1e-5                      # nn.BatchNorm2d default eps
LANE = 128                      # TPU lane width
VMEM_LIMIT = 48 * 1024 * 1024   # safe on v5e/v6e (128 MiB) and v7x (64 MiB physical)


# ----------------------------------------------------------------------------
# small helpers
# ----------------------------------------------------------------------------
def _round_up(x, m):
    return (x + m - 1) // m * m


def _pick_rows_tile(m, target):
    """Largest row-tile <= target that divides m and is bf16-sublane friendly."""
    t = min(target, m)
    for cand in range(t, 15, -1):
        if m % cand == 0 and cand % 16 == 0:
            return cand
    return m   # fall back to a single block (block == full dim is always legal)


def _cparams(*sem):
    return pltpu.CompilerParams(dimension_semantics=sem,
                                vmem_limit_bytes=VMEM_LIMIT)


def _write_tile_stats(st_ref, y):
    """Per-tile BN partials: row-sum + centered 2nd moment (f32), one store."""
    n = y.shape[0]
    s = jnp.sum(y, axis=0, keepdims=True)                        # (1, C)
    m2 = jnp.sum((y - s * (1.0 / n)) ** 2, axis=0, keepdims=True)
    st_ref[...] = jnp.concatenate([s, m2], axis=0)[None]         # (1, 2, C)


def _finalize_bn(stats, gamma_p, beta_p, total_rows):
    """Chan-combine equal-size per-tile partials -> folded (scale, bias)."""
    tiles = stats.shape[0]
    rows_per_tile = total_rows // tiles
    s = stats[:, 0, :]
    m2 = stats[:, 1, :]
    mu_t = s / rows_per_tile
    mu = jnp.sum(s, axis=0) / total_rows
    var = (jnp.sum(m2, axis=0)
           + rows_per_tile * jnp.sum((mu_t - mu[None, :]) ** 2, axis=0)) / total_rows
    scale = gamma_p * lax.rsqrt(var + EPS)
    bias = beta_p - mu * scale
    return (scale.reshape(1, -1).astype(jnp.float32),
            bias.reshape(1, -1).astype(jnp.float32))


def _bn_from_values(y, gamma_p, beta_p):
    """Fold BN scale/bias straight from (small) activation values (JAX glue)."""
    yf = y.astype(jnp.float32)
    red = tuple(range(y.ndim - 1))
    mu = jnp.mean(yf, axis=red)
    var = jnp.mean((yf - mu) ** 2, axis=red)
    scale = gamma_p * lax.rsqrt(var + EPS)
    bias = beta_p - mu * scale
    return scale.reshape(1, -1).astype(jnp.float32), bias.reshape(1, -1).astype(jnp.float32)


# ----------------------------------------------------------------------------
# Pallas kernel bodies
# ----------------------------------------------------------------------------
def _gemm_stats_kernel(x_ref, w_ref, o_ref, st_ref):
    """y = x @ w ; emit bf16 y + per-tile BN partials (on the rounded values)."""
    x = x_ref[...].astype(jnp.bfloat16)
    y = jnp.dot(x, w_ref[...], preferred_element_type=jnp.float32)
    ybf = y.astype(jnp.bfloat16)
    o_ref[...] = ybf
    _write_tile_stats(st_ref, ybf.astype(jnp.float32))


def _gemm2_stats_kernel(x_ref, w_ref, oa_ref, ob_ref, sta_ref, stb_ref):
    """conv1 + shortcut conv fused: ONE wide MXU dot, lane-aligned result split."""
    na = oa_ref.shape[1]
    x = x_ref[...].astype(jnp.bfloat16)
    y = jnp.dot(x, w_ref[...], preferred_element_type=jnp.float32)
    ya = y[:, :na].astype(jnp.bfloat16)
    yb = y[:, na:].astype(jnp.bfloat16)
    oa_ref[...] = ya
    ob_ref[...] = yb
    _write_tile_stats(sta_ref, ya.astype(jnp.float32))
    _write_tile_stats(stb_ref, yb.astype(jnp.float32))


def _norm_relu_gemm_stats_kernel(a_ref, s_ref, b_ref, w_ref, o_ref, st_ref):
    """y = relu(a*scale + bias) @ w ; previous BN fused into the input path."""
    a = jnp.maximum(a_ref[...].astype(jnp.float32) * s_ref[...] + b_ref[...], 0.0)
    y = jnp.dot(a.astype(jnp.bfloat16), w_ref[...],
                preferred_element_type=jnp.float32)
    ybf = y.astype(jnp.bfloat16)
    o_ref[...] = ybf
    _write_tile_stats(st_ref, ybf.astype(jnp.float32))


def _conv3x3_stats_kernel(x_ref, s_ref, b_ref, w_ref, o_ref, st_ref,
                          slab_ref, acc_ref, *, H, W, Wr, TOP):
    """3x3 conv (pad=1, stride 1) via 9 contiguous shifted-row-run GEMMs over a
    flat bf16 slab; bn1+relu fused on the input; bf16 output + BN partials."""
    C = x_ref.shape[3]
    Co = o_ref.shape[3]
    ACC = acc_ref.shape[0]                      # == H * Wr
    BOT = slab_ref.shape[0] - TOP - ACC

    # Zero the top/bottom guard bands every step (cheap, aligned stores, and
    # safe under 'parallel' megacore partitioning).  The per-row right-pad
    # columns are rewritten together with the data below - no full-slab fill.
    slab_ref[pl.ds(0, TOP), :] = jnp.zeros((TOP, C), slab_ref.dtype)
    slab_ref[pl.ds(TOP + ACC, BOT), :] = jnp.zeros((BOT, C), slab_ref.dtype)

    # bn1 + relu on the raw conv1 output (f32 math), cast once to bf16, pad the
    # row pitch to Wr (>= W+2, multiple of 8) and store with ONE aligned store.
    xn = jnp.maximum(
        x_ref[0].astype(jnp.float32) * s_ref[...].reshape(1, 1, C)
        + b_ref[...].reshape(1, 1, C), 0.0).astype(slab_ref.dtype)
    if Wr > W:
        xn = jnp.concatenate(
            [xn, jnp.zeros((H, Wr - W, C), slab_ref.dtype)], axis=1)
    slab_ref[pl.ds(TOP, ACC), :] = xn.reshape(ACC, C)

    # 9 accumulated GEMMs over contiguous, statically-shifted row-runs of the
    # slab (no per-tap window slice+reshape copies); f32 accumulation in VMEM.
    first = True
    for kh in range(3):
        for kw in range(3):
            off = TOP + (kh - 1) * Wr + (kw - 1)
            contrib = jnp.dot(slab_ref[pl.ds(off, ACC), :], w_ref[kh, kw],
                              preferred_element_type=jnp.float32)
            if first:
                acc_ref[...] = contrib
                first = False
            else:
                acc_ref[...] += contrib

    # Extract the valid output columns once; emit bf16 + BN partials.
    y = acc_ref[...].reshape(H, Wr, Co)[:, :W, :]
    ybf = y.astype(jnp.bfloat16)
    o_ref[...] = ybf.reshape(1, H, W, Co)
    _write_tile_stats(st_ref, ybf.astype(jnp.float32).reshape(H * W, Co))


def _final_add_relu_kernel(y3_ref, s3_ref, b3_ref, sc_ref, ss_ref, bs_ref, o_ref):
    """out = relu( bn3(y3) + bn_s(shortcut) )  -- both BNs pre-folded, bf16 out."""
    out = y3_ref[...].astype(jnp.float32) * s3_ref[...] + b3_ref[...]
    sc = sc_ref[...].astype(jnp.float32) * ss_ref[...] + bs_ref[...]
    if sc.shape[1] < out.shape[1]:            # identity-shortcut channel pad
        sc = jnp.concatenate(
            [sc, jnp.zeros((sc.shape[0], out.shape[1] - sc.shape[1]), sc.dtype)],
            axis=1)
    o_ref[...] = jnp.maximum(out + sc, 0.0).astype(o_ref.dtype)


# ----------------------------------------------------------------------------
# pallas_call wrappers (tiled over the pixel axis, "parallel" grid)
# NOTE: constant-index blocks (weights / scale / bias) could additionally be
# single-buffered via pipeline_mode=pl.Buffered(1) for extra VMEM headroom.
# ----------------------------------------------------------------------------
def gemm_stats(x, w, block_rows):
    m, k = x.shape
    n_out = w.shape[1]
    tm = _pick_rows_tile(m, block_rows)
    g = m // tm
    return pl.pallas_call(
        _gemm_stats_kernel,
        grid=(g,),
        in_specs=[pl.BlockSpec((tm, k), lambda i: (i, 0)),
                  pl.BlockSpec((k, n_out), lambda i: (0, 0))],
        out_specs=[pl.BlockSpec((tm, n_out), lambda i: (i, 0)),
                   pl.BlockSpec((1, 2, n_out), lambda i: (i, 0, 0))],
        out_shape=[jax.ShapeDtypeStruct((m, n_out), jnp.bfloat16),
                   jax.ShapeDtypeStruct((g, 2, n_out), jnp.float32)],
        compiler_params=_cparams("parallel"),
    )(x, w)


def gemm2_stats(x, wcat, na, block_rows):
    m, k = x.shape
    nb = wcat.shape[1] - na
    tm = _pick_rows_tile(m, block_rows)
    g = m // tm
    return pl.pallas_call(
        _gemm2_stats_kernel,
        grid=(g,),
        in_specs=[pl.BlockSpec((tm, k), lambda i: (i, 0)),
                  pl.BlockSpec((k, na + nb), lambda i: (0, 0))],
        out_specs=[pl.BlockSpec((tm, na), lambda i: (i, 0)),
                   pl.BlockSpec((tm, nb), lambda i: (i, 0)),
                   pl.BlockSpec((1, 2, na), lambda i: (i, 0, 0)),
                   pl.BlockSpec((1, 2, nb), lambda i: (i, 0, 0))],
        out_shape=[jax.ShapeDtypeStruct((m, na), jnp.bfloat16),
                   jax.ShapeDtypeStruct((m, nb), jnp.bfloat16),
                   jax.ShapeDtypeStruct((g, 2, na), jnp.float32),
                   jax.ShapeDtypeStruct((g, 2, nb), jnp.float32)],
        compiler_params=_cparams("parallel"),
    )(x, wcat)


def norm_relu_gemm_stats(a, scale, bias, w, block_rows):
    m, k = a.shape
    n_out = w.shape[1]
    tm = _pick_rows_tile(m, block_rows)
    g = m // tm
    return pl.pallas_call(
        _norm_relu_gemm_stats_kernel,
        grid=(g,),
        in_specs=[pl.BlockSpec((tm, k), lambda i: (i, 0)),
                  pl.BlockSpec((1, k), lambda i: (0, 0)),
                  pl.BlockSpec((1, k), lambda i: (0, 0)),
                  pl.BlockSpec((k, n_out), lambda i: (0, 0))],
        out_specs=[pl.BlockSpec((tm, n_out), lambda i: (i, 0)),
                   pl.BlockSpec((1, 2, n_out), lambda i: (i, 0, 0))],
        out_shape=[jax.ShapeDtypeStruct((m, n_out), jnp.bfloat16),
                   jax.ShapeDtypeStruct((g, 2, n_out), jnp.float32)],
        compiler_params=_cparams("parallel"),
    )(a, scale, bias, w)


def conv3x3_stats(x_img, scale, bias, w2):
    """Dense (stride-1) 3x3 conv, one image per grid step.
    TODO(synk): add an output-row tiling grid axis (with a 2-row halo) so
    v7x's two TensorCores stay busy when the batch is small/odd."""
    n, h, w, c = x_img.shape
    co = w2.shape[3]
    wr = _round_up(w + 2, 8)            # row pitch; >= W+2 zeros between rows
    top = _round_up(wr + 1, 8)          # top/bottom zero guard bands
    acc_rows = h * wr
    slab_rows = 2 * top + acc_rows
    kernel = functools.partial(_conv3x3_stats_kernel, H=h, W=w, Wr=wr, TOP=top)
    return pl.pallas_call(
        kernel,
        grid=(n,),
        in_specs=[pl.BlockSpec((1, h, w, c), lambda i: (i, 0, 0, 0)),
                  pl.BlockSpec((1, c), lambda i: (0, 0)),
                  pl.BlockSpec((1, c), lambda i: (0, 0)),
                  pl.BlockSpec((3, 3, c, co), lambda i: (0, 0, 0, 0))],
        out_specs=[pl.BlockSpec((1, h, w, co), lambda i: (i, 0, 0, 0)),
                   pl.BlockSpec((1, 2, co), lambda i: (i, 0, 0))],
        out_shape=[jax.ShapeDtypeStruct((n, h, w, co), jnp.bfloat16),
                   jax.ShapeDtypeStruct((n, 2, co), jnp.float32)],
        scratch_shapes=[pltpu.VMEM((slab_rows, c), jnp.bfloat16),
                        pltpu.VMEM((acc_rows, co), jnp.float32)],
        compiler_params=_cparams("parallel"),
    )(x_img, scale, bias, w2)


def final_add_relu(y3, s3, b3, sc, ss, bs, block_rows):
    m, n_out = y3.shape
    n_sc = sc.shape[1]
    tm = _pick_rows_tile(m, block_rows)
    g = m // tm
    return pl.pallas_call(
        _final_add_relu_kernel,
        grid=(g,),
        in_specs=[pl.BlockSpec((tm, n_out), lambda i: (i, 0)),
                  pl.BlockSpec((1, n_out), lambda i: (0, 0)),
                  pl.BlockSpec((1, n_out), lambda i: (0, 0)),
                  pl.BlockSpec((tm, n_sc), lambda i: (i, 0)),
                  pl.BlockSpec((1, n_sc), lambda i: (0, 0)),
                  pl.BlockSpec((1, n_sc), lambda i: (0, 0))],
        out_specs=pl.BlockSpec((tm, n_out), lambda i: (i, 0)),
        out_shape=jax.ShapeDtypeStruct((m, n_out), jnp.bfloat16),
        compiler_params=_cparams("parallel"),
    )(y3, s3, b3, sc, ss, bs)


# ----------------------------------------------------------------------------
# Parameter construction (torch-layout for the reference + padded bf16 for TPU)
# ----------------------------------------------------------------------------
def init_params(key, in_planes, planes):
    exp = 4
    cmid_p = _round_up(planes, LANE)
    cout_p = _round_up(exp * planes, LANE)
    ks = jax.random.split(key, 12)

    def w(k, shape):
        return 0.1 * jax.random.normal(k, shape, jnp.float32)

    p = {
        # torch-layout (OIHW) conv weights, f32 (used by the reference)
        'w1_t': w(ks[0], (planes, in_planes, 1, 1)),
        'w2_t': w(ks[1], (planes, planes, 3, 3)),
        'w3_t': w(ks[2], (exp * planes, planes, 1, 1)),
        'ws_t': w(ks[3], (exp * planes, in_planes, 1, 1)),
        # BN affine params (synthetic, deterministic)
        'g1': 1.0 + 0.1 * jax.random.normal(ks[4], (planes,), jnp.float32),
        'b1': 0.1 * jax.random.normal(ks[5], (planes,), jnp.float32),
        'g2': 1.0 + 0.1 * jax.random.normal(ks[6], (planes,), jnp.float32),
        'b2': 0.1 * jax.random.normal(ks[7], (planes,), jnp.float32),
        'g3': 1.0 + 0.1 * jax.random.normal(ks[8], (exp * planes,), jnp.float32),
        'b3': 0.1 * jax.random.normal(ks[9], (exp * planes,), jnp.float32),
        'gs': 1.0 + 0.1 * jax.random.normal(ks[10], (exp * planes,), jnp.float32),
        'bs': 0.1 * jax.random.normal(ks[11], (exp * planes,), jnp.float32),
    }

    def pad2(a, r, c):
        return jnp.zeros((r, c), jnp.float32).at[:a.shape[0], :a.shape[1]].set(a)

    def padv(v, n, fill):
        return jnp.full((n,), fill, jnp.float32).at[:v.shape[0]].set(v)

    # GEMM-layout weights: K kept at its true (possibly small) size; output
    # channels zero-padded to lane multiples -> lane-dense (unmasked) stores.
    p['w1_p'] = pad2(p['w1_t'][:, :, 0, 0].T, in_planes, cmid_p).astype(jnp.bfloat16)
    p['ws_p'] = pad2(p['ws_t'][:, :, 0, 0].T, in_planes, cout_p).astype(jnp.bfloat16)
    p['w3_p'] = pad2(p['w3_t'][:, :, 0, 0].T, cmid_p, cout_p).astype(jnp.bfloat16)
    w2 = jnp.transpose(p['w2_t'], (2, 3, 1, 0))          # (kh, kw, in, out)
    p['w2_p'] = (jnp.zeros((3, 3, cmid_p, cmid_p), jnp.float32)
                 .at[:, :, :planes, :planes].set(w2)).astype(jnp.bfloat16)

    # padded BN affine params (gamma pad = 1, beta pad = 0 -> padded lanes stay 0)
    p['g1_p'] = padv(p['g1'], cmid_p, 1.0)
    p['b1_p'] = padv(p['b1'], cmid_p, 0.0)
    p['g2_p'] = padv(p['g2'], cmid_p, 1.0)
    p['b2_p'] = padv(p['b2'], cmid_p, 0.0)
    p['g3_p'] = padv(p['g3'], cout_p, 1.0)
    p['b3_p'] = padv(p['b3'], cout_p, 0.0)
    p['gs_p'] = padv(p['gs'], cout_p, 1.0)
    p['bs_p'] = padv(p['bs'], cout_p, 0.0)
    return p


# ----------------------------------------------------------------------------
# Forward pass
# ----------------------------------------------------------------------------
def bottleneck_pallas(x_nchw, p, stride, block_rows=512):
    planes = p['w1_t'].shape[0]
    in_planes = p['w1_t'].shape[1]
    exp_planes = 4 * planes
    cmid_p = p['w1_p'].shape[1]
    cout_p = p['w3_p'].shape[1]

    x = jnp.transpose(x_nchw, (0, 2, 3, 1)).astype(jnp.float32)      # NHWC
    N, H, W, _ = x.shape
    Ho = (H + 2 - 3) // stride + 1
    Wo = (W + 2 - 3) // stride + 1
    M = N * H * W
    Mo = N * Ho * Wo
    x2d = x.reshape(M, in_planes)        # true-K LHS; cast to bf16 in-kernel

    needs_sc_conv = (stride != 1) or (in_planes != exp_planes)

    # ---- conv1 (1x1) [+ shortcut conv fused as one wide GEMM when stride==1] -
    if needs_sc_conv and stride == 1:
        wcat = jnp.concatenate([p['w1_p'], p['ws_p']], axis=1)
        y1_raw, ysc_raw, st1, sts = gemm2_stats(x2d, wcat, cmid_p, block_rows)
    else:
        y1_raw, st1 = gemm_stats(x2d, p['w1_p'], block_rows)
        if needs_sc_conv:
            xs2d = x[:, ::stride, ::stride, :].reshape(Mo, in_planes)
            ysc_raw, sts = gemm_stats(xs2d, p['ws_p'], block_rows)
        else:
            ysc_raw, sts = x2d, None                                  # identity shortcut

    scale1, bias1 = _finalize_bn(st1, p['g1_p'], p['b1_p'], M)

    # ---- conv2 (3x3, pad 1); bn1+relu fused into its input path --------------
    y2_dense, st2 = conv3x3_stats(y1_raw.reshape(N, H, W, cmid_p),
                                  scale1, bias1, p['w2_p'])
    if stride == 1:
        y2_raw = y2_dense
        scale2, bias2 = _finalize_bn(st2, p['g2_p'], p['b2_p'], M)
    else:
        # TODO(synk): stride>1 computes the dense 3x3 conv and subsamples here;
        # a dedicated strided-row-read kernel would avoid the extra MXU work.
        y2_raw = y2_dense[:, ::stride, ::stride, :]
        scale2, bias2 = _bn_from_values(y2_raw, p['g2_p'], p['b2_p'])

    # ---- conv3 (1x1); bn2+relu fused into its input path ---------------------
    y3_raw, st3 = norm_relu_gemm_stats(y2_raw.reshape(Mo, cmid_p),
                                       scale2, bias2, p['w3_p'], block_rows)
    scale3, bias3 = _finalize_bn(st3, p['g3_p'], p['b3_p'], Mo)

    if needs_sc_conv:
        scale_s, bias_s = _finalize_bn(sts, p['gs_p'], p['bs_p'], Mo)
    else:
        n_sc = ysc_raw.shape[1]
        scale_s = jnp.ones((1, n_sc), jnp.float32)
        bias_s = jnp.zeros((1, n_sc), jnp.float32)

    # ---- bn3 + shortcut-BN + residual add + final relu, all fused (bf16 out) -
    out2d = final_add_relu(y3_raw, scale3, bias3, ysc_raw, scale_s, bias_s, block_rows)
    out = out2d.reshape(N, Ho, Wo, cout_p)[..., :exp_planes].astype(jnp.float32)
    return jnp.transpose(out, (0, 3, 1, 2))                           # back to NCHW

# TODO(synk): BatchNorm running_mean/running_var buffer updates (training-mode
# side effect only) are not reproduced; they do not affect the forward output.


# ----------------------------------------------------------------------------
# Pure-JAX reference (mirrors the PyTorch forward in train mode, f32 HIGHEST)
# ----------------------------------------------------------------------------
def _ref_conv(x, w, stride=1, padding='VALID'):
    return lax.conv_general_dilated(
        x, w, (stride, stride), padding,
        dimension_numbers=('NCHW', 'OIHW', 'NCHW'),
        precision=lax.Precision.HIGHEST)


def _ref_bn(x, g, b):
    mu = jnp.mean(x, axis=(0, 2, 3), keepdims=True)
    var = jnp.mean((x - mu) ** 2, axis=(0, 2, 3), keepdims=True)
    return (x - mu) * lax.rsqrt(var + EPS) * g.reshape(1, -1, 1, 1) + b.reshape(1, -1, 1, 1)


def bottleneck_ref(x, p, stride, in_planes, planes):
    out = jax.nn.relu(_ref_bn(_ref_conv(x, p['w1_t']), p['g1'], p['b1']))
    out = jax.nn.relu(_ref_bn(_ref_conv(out, p['w2_t'], stride, ((1, 1), (1, 1))),
                              p['g2'], p['b2']))
    out = _ref_bn(_ref_conv(out, p['w3_t']), p['g3'], p['b3'])
    if stride != 1 or in_planes != 4 * planes:
        sc = _ref_bn(_ref_conv(x, p['ws_t'], stride), p['gs'], p['bs'])
    else:
        sc = x
    return jax.nn.relu(out + sc)


# ----------------------------------------------------------------------------
if __name__ == "__main__":
    in_planes, planes = 4, 4           # shortcut conv path active (4 != 16)
    N, H, W = 2, 16, 16

    key = jax.random.PRNGKey(0)
    kx, kp = jax.random.split(key)
    x = jax.random.normal(kx, (N, in_planes, H, W), jnp.float32)
    params = init_params(kp, in_planes, planes)

    # block_rows=128 -> multi-tile pipelined "parallel" grid is exercised.
    for stride in (1, 2):
        out = bottleneck_pallas(x, params, stride, block_rows=128)
        out = jax.block_until_ready(out)

        ref = bottleneck_ref(x, params, stride, in_planes, planes)
        Ho = (H + 2 - 3) // stride + 1
        assert out.shape == ref.shape == (N, 4 * planes, Ho, Ho)

        max_err = float(jnp.max(jnp.abs(out - ref)))
        mean_err = float(jnp.mean(jnp.abs(out - ref)))
        # tolerance scaled to the output magnitude: the kernel path uses bf16
        # MXU matmuls + bf16 intermediate/output storage (f32 accumulation and
        # f32 BN / epilogue math).
        tol = 3e-2 * max(1.0, float(jnp.max(jnp.abs(ref))))
        assert max_err < tol, f"stride={stride}: max err {max_err} (tol {tol})"
        assert mean_err < 2e-2, f"stride={stride}: mean err {mean_err}"

    print("KERNEL_OK")
</pallas_src>

<mosaic_0001>
module attributes {stable_mosaic.version = 11 : i64} {
  func.func @_gemm2_stats_kernel(%arg0: i32, %arg1: memref<128x4xf32, #tpu.memory_space<vmem>>, %arg2: memref<4x256xbf16, #tpu.memory_space<vmem>>, %arg3: memref<128x128xbf16, #tpu.memory_space<vmem>>, %arg4: memref<128x128xbf16, #tpu.memory_space<vmem>>, %arg5: memref<1x2x128xf32, #tpu.memory_space<vmem>>, %arg6: memref<1x2x128xf32, #tpu.memory_space<vmem>>) attributes {dimension_semantics = [#tpu.dimension_semantics<parallel>], iteration_bounds = array<i64: 4>, scalar_prefetch = 0 : i64, scratch_operands = 0 : i64, tpu.core_type = #tpu.core_type<tc>, window_params = [{transform_indices = @transform_0, window_bounds = array<i64: 128, 4>}, {pipeline_mode = #tpu.pipeline_mode<synchronous>, transform_indices = @transform_1, window_bounds = array<i64: 4, 256>}, {transform_indices = @transform_2, window_bounds = array<i64: 128, 128>}, {transform_indices = @transform_3, window_bounds = array<i64: 128, 128>}, {transform_indices = @transform_4, window_bounds = array<i64: 1, 2, 128>}, {transform_indices = @transform_5, window_bounds = array<i64: 1, 2, 128>}]} {
    %c0 = arith.constant 0 : index
    %c0_0 = arith.constant 0 : index
    %0 = vector.load %arg1[%c0, %c0_0] : memref<128x4xf32, #tpu.memory_space<vmem>>, vector<128x4xf32>
    %1 = arith.truncf %0 : vector<128x4xf32> to vector<128x4xbf16>
    %c0_1 = arith.constant 0 : index
    %c0_2 = arith.constant 0 : index
    %2 = vector.load %arg2[%c0_1, %c0_2] : memref<4x256xbf16, #tpu.memory_space<vmem>>, vector<4x256xbf16>
    %cst = arith.constant dense<0.000000e+00> : vector<128x256xf32>
    %3 = tpu.matmul %1, %2, %cst {dimension_numbers = #tpu.dot_dimension_numbers<[1], [0], [0], [1], [0, 0, 1, 1], [], []>} : vector<128x4xbf16>, vector<4x256xbf16>, vector<128x256xf32> -> vector<128x256xf32>
    %4 = vector.extract_strided_slice %3 {offsets = [0, 0], sizes = [128, 128], strides = [1, 1]} : vector<128x256xf32> to vector<128x128xf32>
    %5 = arith.truncf %4 : vector<128x128xf32> to vector<128x128xbf16>
    %6 = vector.extract_strided_slice %3 {offsets = [0, 128], sizes = [128, 128], strides = [1, 1]} : vector<128x256xf32> to vector<128x128xf32>
    %7 = arith.truncf %6 : vector<128x128xf32> to vector<128x128xbf16>
    %c0_3 = arith.constant 0 : index
    %c0_4 = arith.constant 0 : index
    %8 = vector.load %arg3[%c0_3, %c0_4] : memref<128x128xbf16, #tpu.memory_space<vmem>>, vector<128x128xbf16>
    tpu.vector_store %arg3[%c0_3, %c0_4], %5 {strides = array<i32>} : memref<128x128xbf16, #tpu.memory_space<vmem>>, vector<128x128xbf16>,
    %c0_5 = arith.constant 0 : index
    %c0_6 = arith.constant 0 : index
    %9 = vector.load %arg4[%c0_5, %c0_6] : memref<128x128xbf16, #tpu.memory_space<vmem>>, vector<128x128xbf16>
    tpu.vector_store %arg4[%c0_5, %c0_6], %7 {strides = array<i32>} : memref<128x128xbf16, #tpu.memory_space<vmem>>, vector<128x128xbf16>,
    %10 = arith.extf %5 : vector<128x128xbf16> to vector<128x128xf32>
    %cst_7 = arith.constant dense<0.000000e+00> : vector<128xf32>
    %11 = vector.multi_reduction <add>, %10, %cst_7 [0] : vector<128x128xf32> to vector<128xf32>
    %12 = vector.shape_cast %11 : vector<128xf32> to vector<1x128xf32>
    %cst_8 = arith.constant 7.812500e-03 : f32
    %13 = vector.broadcast %cst_8 : f32 to vector<1x128xf32>
    %14 = arith.mulf %12, %13 : vector<1x128xf32>
    %15 = vector.broadcast %14 : vector<1x128xf32> to vector<128x128xf32>
    %16 = arith.subf %10, %15 : vector<128x128xf32>
    %17 = arith.mulf %16, %16 : vector<128x128xf32>
    %cst_9 = arith.constant dense<0.000000e+00> : vector<128xf32>
    %18 = vector.multi_reduction <add>, %17, %cst_9 [0] : vector<128x128xf32> to vector<128xf32>
    %19 = vector.shape_cast %18 : vector<128xf32> to vector<1x128xf32>
    %20 = tpu.concatenate %12, %19 in 0 : vector<1x128xf32>, vector<1x128xf32> -> vector<2x128xf32>
    %21 = vector.shape_cast %20 : vector<2x128xf32> to vector<1x2x128xf32>
    %c0_10 = arith.constant 0 : index
    %c0_11 = arith.constant 0 : index
    %c0_12 = arith.constant 0 : index
    %22 = vector.load %arg5[%c0_10, %c0_11, %c0_12] : memref<1x2x128xf32, #tpu.memory_space<vmem>>, vector<1x2x128xf32>
    tpu.vector_store %arg5[%c0_10, %c0_11, %c0_12], %21 {strides = array<i32>} : memref<1x2x128xf32, #tpu.memory_space<vmem>>, vector<1x2x128xf32>,
    %23 = arith.extf %7 : vector<128x128xbf16> to vector<128x128xf32>
    %cst_13 = arith.constant dense<0.000000e+00> : vector<128xf32>
    %24 = vector.multi_reduction <add>, %23, %cst_13 [0] : vector<128x128xf32> to vector<128xf32>
    %25 = vector.shape_cast %24 : vector<128xf32> to vector<1x128xf32>
    %cst_14 = arith.constant 7.812500e-03 : f32
    %26 = vector.broadcast %cst_14 : f32 to vector<1x128xf32>
    %27 = arith.mulf %25, %26 : vector<1x128xf32>
    %28 = vector.broadcast %27 : vector<1x128xf32> to vector<128x128xf32>
    %29 = arith.subf %23, %28 : vector<128x128xf32>
    %30 = arith.mulf %29, %29 : vector<128x128xf32>
    %cst_15 = arith.constant dense<0.000000e+00> : vector<128xf32>
    %31 = vector.multi_reduction <add>, %30, %cst_15 [0] : vector<128x128xf32> to vector<128xf32>
    %32 = vector.shape_cast %31 : vector<128xf32> to vector<1x128xf32>
    %33 = tpu.concatenate %25, %32 in 0 : vector<1x128xf32>, vector<1x128xf32> -> vector<2x128xf32>
    %34 = vector.shape_cast %33 : vector<2x128xf32> to vector<1x2x128xf32>
    %c0_16 = arith.constant 0 : index
    %c0_17 = arith.constant 0 : index
    %c0_18 = arith.constant 0 : index
    %35 = vector.load %arg6[%c0_16, %c0_17, %c0_18] : memref<1x2x128xf32, #tpu.memory_space<vmem>>, vector<1x2x128xf32>
    tpu.vector_store %arg6[%c0_16, %c0_17, %c0_18], %34 {strides = array<i32>} : memref<1x2x128xf32, #tpu.memory_space<vmem>>, vector<1x2x128xf32>,
    return
  }
  func.func @transform_0(%arg0: i32) -> (i32, i32) {
    %c0_i32 = arith.constant 0 : i32
    %c0_i32_0 = arith.constant 0 : i32
    return %arg0, %c0_i32 : i32, i32
  }
  func.func @transform_1(%arg0: i32) -> (i32, i32) {
    %c0_i32 = arith.constant 0 : i32
    %c0_i32_0 = arith.constant 0 : i32
    %c0_i32_1 = arith.constant 0 : i32
    return %c0_i32, %c0_i32_0 : i32, i32
  }
  func.func @transform_2(%arg0: i32) -> (i32, i32) {
    %c0_i32 = arith.constant 0 : i32
    %c0_i32_0 = arith.constant 0 : i32
    return %arg0, %c0_i32 : i32, i32
  }
  func.func @transform_3(%arg0: i32) -> (i32, i32) {
    %c0_i32 = arith.constant 0 : i32
    %c0_i32_0 = arith.constant 0 : i32
    return %arg0, %c0_i32 : i32, i32
  }
  func.func @transform_4(%arg0: i32) -> (i32, i32, i32) {
    %c0_i32 = arith.constant 0 : i32
    %c0_i32_0 = arith.constant 0 : i32
    %c0_i32_1 = arith.constant 0 : i32
    return %arg0, %c0_i32, %c0_i32_0 : i32, i32, i32
  }
  func.func @transform_5(%arg0: i32) -> (i32, i32, i32) {
    %c0_i32 = arith.constant 0 : i32
    %c0_i32_0 = arith.constant 0 : i32
    %c0_i32_1 = arith.constant 0 : i32
    return %arg0, %c0_i32, %c0_i32_0 : i32, i32, i32
  }
}

</mosaic_0001>

<llo_original>
// kernel: tpu_custom_call.1
$region0: #{tpu_custom_call.1}
  #allocation0 [shape = 'u32[]', space=smem, size = 0x4, offset = 0x4, fixed_abs, tag = 'smem constant byte address 0x4 - core index']
  #allocation1 [shape = 'u32[144,128]{1,0:T(1,128)}', space=vmem, size = 0x12000, scoped, tag = 'internal scratch']
  %s0 = inlined_call_operand.vmem [shape: f32[512,4], index: 0, kind: input, shape index: {}]
  %s1 = inlined_call_operand.vmem [shape: bf16[4,256], index: 1, kind: input, shape index: {}]
  %s2 = inlined_call_operand.hbm [shape: bf16[512,128], index: 2, kind: output, shape index: {0}]
  %s3 = inlined_call_operand.hbm [shape: bf16[512,128], index: 3, kind: output, shape index: {1}]
  %s4 = inlined_call_operand.hbm [shape: f32[4,2,128], index: 4, kind: output, shape index: {2}]
  %s5 = inlined_call_operand.hbm [shape: f32[4,2,128], index: 5, kind: output, shape index: {3}]
  %6 = xla_tuple %s2, %s3, %s4, %s5
  %s7 = sld [smem:[#allocation0]]
  $region65: #{tpu_custom_call.1} parent=0
    _
  %s9 = ssub.s32 1, %s7
  %s10 = scalar_select 0, %s9, %s7
  $region1: #{tpu_custom_call.1} parent=0
    #allocation2 [shape = 'u8[65536]{0}', space=vmem, size = 0x10000, scoped, tag = 'output window, operand 0']
    #allocation3 [shape = 's32[2]{0}', space=sflag, size = 0x8, scoped, tag = 'scoped memory for tpu_custom_call.1']
    #allocation4 [shape = 'u8[65536]{0}', space=vmem, size = 0x10000, scoped, tag = 'output window, operand 1']
    #allocation5 [shape = 's32[2]{0}', space=sflag, size = 0x8, scoped, tag = 'scoped memory for tpu_custom_call.1']
    #allocation6 [shape = 'u8[2048]{0}', space=vmem, size = 0x800, scoped, tag = 'output window, operand 2']
    #allocation7 [shape = 'u8[2048]{0}', space=vmem, size = 0x800, scoped, tag = 'output window, operand 3']
    #allocation8 [shape = 's32[2]{0}', space=sflag, size = 0x8, scoped, tag = 'scoped memory for tpu_custom_call.1']
    %11 = vsyncpa [#allocation3], 0
    %s12 = scalar_lea.sflag [#allocation3], 1
    %13 = vsyncpa %s12, 0
    %14 = vsyncpa [#allocation5], 0
    %s15 = scalar_lea.sflag [#allocation5], 1
    %16 = vsyncpa %s15, 0
    %17 = vsyncpa [#allocation8], 0
    %s18 = scalar_lea.sflag [#allocation8], 1
    %19 = vsyncpa %s18, 0
    loop: start=0, step=1, limit=6
    $region2: #{tpu_custom_call.1} parent=1 // loop_pre_header
      _
    $region3: #{tpu_custom_call.1} parent=1 // loop_header
      %s21 = sphi 0, %s25
      %p22 = scmp.ge.s32.totalorder %s21, 6
      %s31 = sphi 0, %s33
      %s34 = sphi 0, %s31
      %s35 = sphi 0, %s34
      %s51 = sphi 0, %s35
      %s55 = sphi 0, %s55
      %s57 = sphi 0, %s55
      %s58 = sphi 0, %s57
      %s72 = sphi 0, %s58
      %s78 = sphi 0, %s80
      %s81 = sphi 0, %s78
      %s82 = sphi 0, %s81
      %s98 = sphi 0, %s82
      %s104 = sphi 0, %s106
      %s107 = sphi 0, %s104
      %s108 = sphi 0, %s107
      %s124 = sphi 0, %s108
      %s130 = sphi 0, %s132
      %s133 = sphi 0, %s130
      %s134 = sphi 0, %s133
      %s150 = sphi 0, %s134
      %s156 = sphi 0, %s158
      %s159 = sphi 0, %s156
      %s160 = sphi 0, %s159
      %s176 = sphi 0, %s160
    $region4: #{tpu_custom_call.1} parent=1 // loop_header_branch
      %24 = sbr.rel (%p22) target = $region8
    $region5: #{tpu_custom_call.1} parent=1 // loop_body
      %s26 = ssub.s32 %s21, 1
      %s27 = ssub.s32 %s21, 2
      %s28 = sadd.s32 %s21, 1
      %s29 = ssub.s32 %s21, %s28
      %p30 = scmp.eq.s32.totalorder %s29, 0
      %s32 = sadd.s32 %s31, 1
      %s33 = scalar_select %p30, %s31, %s32
      %p36 = pneg %p30
      %p37 = scmp.eq.s32.totalorder %s21, 3
      %p38 = por %p36, %p37
      %p39 = scmp.ne.s32.totalorder %s31, %s34
      %p40 = scmp.eq.s32.totalorder %s21, 0
      %p41 = por %p39, %p40
      %p42 = scmp.ne.s32.totalorder %s31, %s34
      %p43 = scmp.eq.s32.totalorder %s26, 3
      %p44 = por %p42, %p43
      %p45 = scmp.ne.s32.totalorder %s34, %s35
      %p46 = scmp.eq.s32.totalorder %s26, 0
      %p47 = por %p45, %p46
      %p48 = scmp.ne.s32.totalorder %s34, %s35
      %p49 = scmp.eq.s32.totalorder %s27, 3
      %p50 = por %p48, %p49
      %p52 = scmp.ne.s32.totalorder %s35, %s51
      %p53 = scmp.eq.s32.totalorder %s27, 0
      %p54 = por %p52, %p53
      %s56 = sadd.s32 %s55, 1
      %p59 = scmp.eq.s32.totalorder %s21, 3
      %p60 = scmp.ne.s32.totalorder %s55, %s57
      %p61 = scmp.eq.s32.totalorder %s21, 0
      %p62 = por %p60, %p61
      %p63 = scmp.ne.s32.totalorder %s55, %s57
      %p64 = scmp.eq.s32.totalorder %s26, 3
      %p65 = por %p63, %p64
      %p66 = scmp.ne.s32.totalorder %s57, %s58
      %p67 = scmp.eq.s32.totalorder %s26, 0
      %p68 = por %p66, %p67
      %p69 = scmp.ne.s32.totalorder %s57, %s58
      %p70 = scmp.eq.s32.totalorder %s27, 3
      %p71 = por %p69, %p70
      %p73 = scmp.ne.s32.totalorder %s58, %s72
      %p74 = scmp.eq.s32.totalorder %s27, 0
      %p75 = por %p73, %p74
      %s76 = ssub.s32 %s21, %s28
      %p77 = scmp.eq.s32.totalorder %s76, 0
      %s79 = sadd.s32 %s78, 1
      %s80 = scalar_select %p77, %s78, %s79
      %p83 = pneg %p77
      %p84 = scmp.eq.s32.totalorder %s21, 3
      %p85 = por %p83, %p84
      %p86 = scmp.ne.s32.totalorder %s78, %s81
      %p87 = scmp.eq.s32.totalorder %s21, 0
      %p88 = por %p86, %p87
      %p89 = scmp.ne.s32.totalorder %s78, %s81
      %p90 = scmp.eq.s32.totalorder %s26, 3
      %p91 = por %p89, %p90
      %p92 = scmp.ne.s32.totalorder %s81, %s82
      %p93 = scmp.eq.s32.totalorder %s26, 0
      %p94 = por %p92, %p93
      %p95 = scmp.ne.s32.totalorder %s81, %s82
      %p96 = scmp.eq.s32.totalorder %s27, 3
      %p97 = por %p95, %p96
      %p99 = scmp.ne.s32.totalorder %s82, %s98
      %p100 = scmp.eq.s32.totalorder %s27, 0
      %p101 = por %p99, %p100
      %s102 = ssub.s32 %s21, %s28
      %p103 = scmp.eq.s32.totalorder %s102, 0
      %s105 = sadd.s32 %s104, 1
      %s106 = scalar_select %p103, %s104, %s105
      %p109 = pneg %p103
      %p110 = scmp.eq.s32.totalorder %s21, 3
      %p111 = por %p109, %p110
      %p112 = scmp.ne.s32.totalorder %s104, %s107
      %p113 = scmp.eq.s32.totalorder %s21, 0
      %p114 = por %p112, %p113
      %p115 = scmp.ne.s32.totalorder %s104, %s107
      %p116 = scmp.eq.s32.totalorder %s26, 3
      %p117 = por %p115, %p116
      %p118 = scmp.ne.s32.totalorder %s107, %s108
      %p119 = scmp.eq.s32.totalorder %s26, 0
      %p120 = por %p118, %p119
      %p121 = scmp.ne.s32.totalorder %s107, %s108
      %p122 = scmp.eq.s32.totalorder %s27, 3
      %p123 = por %p121, %p122
      %p125 = scmp.ne.s32.totalorder %s108, %s124
      %p126 = scmp.eq.s32.totalorder %s27, 0
      %p127 = por %p125, %p126
      %s128 = ssub.s32 %s21, %s28
      %p129 = scmp.eq.s32.totalorder %s128, 0
      %s131 = sadd.s32 %s130, 1
      %s132 = scalar_select %p129, %s130, %s131
      %p135 = pneg %p129
      %p136 = scmp.eq.s32.totalorder %s21, 3
      %p137 = por %p135, %p136
      %p138 = scmp.ne.s32.totalorder %s130, %s133
      %p139 = scmp.eq.s32.totalorder %s21, 0
      %p140 = por %p138, %p139
      %p141 = scmp.ne.s32.totalorder %s130, %s133
      %p142 = scmp.eq.s32.totalorder %s26, 3
      %p143 = por %p141, %p142
      %p144 = scmp.ne.s32.totalorder %s133, %s134
      %p145 = scmp.eq.s32.totalorder %s26, 0
      %p146 = por %p144, %p145
      %p147 = scmp.ne.s32.totalorder %s133, %s134
      %p148 = scmp.eq.s32.totalorder %s27, 3
      %p149 = por %p147, %p148
      %p151 = scmp.ne.s32.totalorder %s134, %s150
      %p152 = scmp.eq.s32.totalorder %s27, 0
      %p153 = por %p151, %p152
      %s154 = ssub.s32 %s21, %s28
      %p155 = scmp.eq.s32.totalorder %s154, 0
      %s157 = sadd.s32 %s156, 1
      %s158 = scalar_select %p155, %s156, %s157
      %p161 = pneg %p155
      %p162 = scmp.eq.s32.totalorder %s21, 3
      %p163 = por %p161, %p162
      %p164 = scmp.ne.s32.totalorder %s156, %s159
      %p165 = scmp.eq.s32.totalorder %s21, 0
      %p166 = por %p164, %p165
      %p167 = scmp.ne.s32.totalorder %s156, %s159
      %p168 = scmp.eq.s32.totalorder %s26, 3
      %p169 = por %p167, %p168
      %p170 = scmp.ne.s32.totalorder %s159, %s160
      %p171 = scmp.eq.s32.totalorder %s26, 0
      %p172 = por %p170, %p171
      %p173 = scmp.ne.s32.totalorder %s159, %s160
      %p174 = scmp.eq.s32.totalorder %s27, 3
      %p175 = por %p173, %p174
      %p177 = scmp.ne.s32.totalorder %s160, %s176
      %p178 = scmp.eq.s32.totalorder %s27, 0
      %p179 = por %p177, %p178
      %p180 = scmp.le.s32.totalorder 1, %s21
      %p181 = scmp.lt.s32.totalorder %s21, 5
      %p182 = pnand %p180, %p181
      %p183 = pneg %p182
      // Predicated region
      $region9: #{tpu_custom_call.1} parent=5 // pred_check
        _
      $region10: #{tpu_custom_call.1} parent=5 // pred_check_branch
        %185 = sbr.rel (%p182) target = $region12
      $region11: #{tpu_custom_call.1} parent=5 // pred_region
        %s186 = ssub.s32 %s21, 1
        // Predicated region
        $region13: #{tpu_custom_call.1} parent=11 // pred_check
          %p187 = pneg %p68
        $region14: #{tpu_custom_call.1} parent=11 // pred_check_branch
          %189 = sbr.rel (%p187) target = $region16
        $region15: #{tpu_custom_call.1} parent=11 // pred_region
          _
        $region16: #{tpu_custom_call.1} parent=11 // pred_fallthru
          _
      $region12: #{tpu_custom_call.1} parent=5 // pred_fallthru
        _
      %p190 = scmp.lt.s32.totalorder %s21, 4
      // Predicated region
      $region17: #{tpu_custom_call.1} parent=5 // pred_check
        %p191 = pneg %p190
      $region18: #{tpu_custom_call.1} parent=5 // pred_check_branch
        %193 = sbr.rel (%p191) target = $region20
      $region19: #{tpu_custom_call.1} parent=5 // pred_region
        // Predicated region
        $region21: #{tpu_custom_call.1} parent=19 // pred_check
          %p194 = pneg %p41
        $region22: #{tpu_custom_call.1} parent=19 // pred_check_branch
          %196 = sbr.rel (%p194) target = $region24
        $region23: #{tpu_custom_call.1} parent=19 // pred_region
          %s197 = smul.u32 16, %s21
          %p198 = scmp.lt.s32.totalorder %s197, 63
          %s199 = scalar_select %p198, %s197, 63
          %s200 = smul.addr %s199, 8
          %s201 = scalar_lea.vmem %s0, %s200
          %s202 = smul.u32 16, %s21
        $region24: #{tpu_custom_call.1} parent=19 // pred_fallthru
          _
      $region20: #{tpu_custom_call.1} parent=5 // pred_fallthru
        _
      %p203 = scmp.le.s32.totalorder 1, %s21
      %p204 = scmp.lt.s32.totalorder %s21, 5
      %p205 = pnand %p203, %p204
      %p206 = pneg %p205
      // Predicated region
      $region25: #{tpu_custom_call.1} parent=5 // pred_check
        _
      $region26: #{tpu_custom_call.1} parent=5 // pred_check_branch
        %208 = sbr.rel (%p205) target = $region28
      $region27: #{tpu_custom_call.1} parent=5 // pred_region
        %s209 = ssub.s32 %s21, 1
        %s210 = smul.u32 16, %s26
        %p211 = scmp.lt.s32.totalorder %s210, 63
        %s212 = scalar_select %p211, %s210, 63
        %s213 = smul.addr %s212, 8
        %s214 = scalar_lea.vmem %s0, %s213
        %p215 = pneg %p47
        %p216 = pneg %p44
        %p217 = pneg %p68
        %p218 = pneg %p65
        %p219 = pneg %p94
        %p220 = pneg %p91
        %s221 = sand.u32 %s81, 1
        %s222 = scalar_lea.sflag [#allocation3], %s221
        %s223 = sand.u32 %s81, 1
        %s224 = smul.addr %s223, 64
        %s225 = scalar_lea.vmem [#allocation2], %s224
        %p226 = pneg %p120
        %p227 = pneg %p117
        %s228 = sand.u32 %s26, 1
        %s229 = scalar_lea.sflag [#allocation5], %s228
        %s230 = sand.u32 %s107, 1
        %s231 = smul.addr %s230, 64
        %s232 = scalar_lea.vmem [#allocation4], %s231
        %p233 = pneg %p146
        %p234 = pneg %p143
        %s235 = sand.u32 %s26, 1
        %s236 = scalar_lea.sflag [#allocation5], %s235
        %s237 = sand.u32 %s133, 1
        %s238 = smul.addr %s237, 2
        %s239 = scalar_lea.vmem [#allocation6], %s238
        %p240 = pneg %p172
        %p241 = pneg %p169
        %s242 = sand.u32 %s159, 1
        %s243 = scalar_lea.sflag [#allocation8], %s242
        %s244 = sand.u32 %s159, 1
        %s245 = smul.addr %s244, 2
        %s246 = scalar_lea.vmem [#allocation7], %s245
        %s247 = smul.u32 16, %s26
        %p248 = scmp.lt.s32.totalorder %s247, 63
        %s249 = scalar_select %p248, %s247, 63
        %s250 = smul.addr %s249, 8
        %s251 = scalar_lea.vmem %s0, %s250
        %s252 = smul.u32 16, %s26
        %s253 = smul.u32 16, %s26
        %s254 = smul.u32 16, %s26
        %v256 = vld [vmem:[%s251] sm:$0xff]
        %v257 = vld [vmem:[%s251 + $0x8] sm:$0xff]
        %v258 = vld [vmem:[%s251 + $0x10] sm:$0xff]
        %v259 = vld [vmem:[%s251 + $0x18] sm:$0xff]
        %v260 = vld [vmem:[%s251 + $0x20] sm:$0xff]
        %v261 = vld [vmem:[%s251 + $0x28] sm:$0xff]
        %v262 = vld [vmem:[%s251 + $0x30] sm:$0xff]
        %v263 = vld [vmem:[%s251 + $0x38] sm:$0xff]
        %v264 = vld [vmem:[%s251 + $0x40] sm:$0xff]
        %v265 = vld [vmem:[%s251 + $0x48] sm:$0xff]
        %v266 = vld [vmem:[%s251 + $0x50] sm:$0xff]
        %v267 = vld [vmem:[%s251 + $0x58] sm:$0xff]
        %v268 = vld [vmem:[%s251 + $0x60] sm:$0xff]
        %v269 = vld [vmem:[%s251 + $0x68] sm:$0xff]
        %v270 = vld [vmem:[%s251 + $0x70] sm:$0xff]
        %v271 = vld [vmem:[%s251 + $0x78] sm:$0xff]
        %v272 = vpack.c.bf16 %v257, %v256
        %v273 = vpack.c.bf16 %v259, %v258
        %v274 = vpack.c.bf16 %v261, %v260
        %v275 = vpack.c.bf16 %v263, %v262
        %v276 = vpack.c.bf16 %v265, %v264
        %v277 = vpack.c.bf16 %v267, %v266
        %v278 = vpack.c.bf16 %v269, %v268
        %v279 = vpack.c.bf16 %v271, %v270
        %v280 = vld [vmem:[%s1] sm:$0xf]
        %v283 = vunpack.c.l.s4 1983009808
        %v284 = vunpack.c.0.s8 %v283
        %v285 = vlaneseq
        %v286 = vshrl.u32 %v285, 7
        %v287 = vsub.s32 %v284, %v286
        %v288 = vrot.slane %v280, %v287
        %v289 = vcombine.high %v288, %v288
        %vm290 = vcmask 31744
        %v292 = vsel %vm290, %v272, 0
        %v295 = vsel %vm290, %v273, 0
        %v298 = vsel %vm290, %v274, 0
        %v301 = vsel %vm290, %v275, 0
        %v304 = vsel %vm290, %v276, 0
        %v307 = vsel %vm290, %v277, 0
        %v310 = vsel %vm290, %v278, 0
        %v313 = vsel %vm290, %v279, 0
        %vm315 = vcmask 1041408
        %v317 = vsel %vm315, %v288, 0
        %v320 = vsel %vm315, %v289, 0
        %322 = vmatprep.subr.bf16.mxu0 0
        %323 = vmatpush1.bf16.msra.mxu0 0
        %324 = vmatprep.subr.bf16.mxu0 0
        %325 = vmatpush1.bf16.msra.mxu0 0
        %326 = vmatprep.subr.bf16.mxu0 0
        %327 = vmatpush1.bf16.msra.mxu0 0
        %328 = vmatprep.subr.bf16.mxu0 0
        %329 = vmatpush1.bf16.msra.mxu0 0
        %330 = vmatprep.subr.bf16.mxu0 0
        %331 = vmatpush1.bf16.msra.mxu0 0
        %332 = vmatprep.subr.bf16.mxu0 0
        %333 = vmatpush1.bf16.msra.mxu0 0
        %334 = vmatprep.subr.bf16.mxu0 0
        %335 = vmatpush1.bf16.msra.mxu0 0
        %336 = vmatprep.subr.bf16.mxu0 %v320
        %337 = vmatpush1.bf16.msra.mxu0 %v317
        %338 = vmatprep.subr.bf16.mxu0 0
        %339 = vmatpush2.bf16.msra.mxu0 0
        %340 = vmatprep.subr.bf16.mxu0 0
        %341 = vmatpush2.bf16.msra.mxu0 0
        %342 = vmatprep.subr.bf16.mxu0 0
        %343 = vmatpush2.bf16.msra.mxu0 0
        %344 = vmatprep.subr.bf16.mxu0 0
        %345 = vmatpush2.bf16.msra.mxu0 0
        %346 = vmatprep.subr.bf16.mxu0 0
        %347 = vmatpush2.bf16.msra.mxu0 0
        %348 = vmatprep.subr.bf16.mxu0 0
        %349 = vmatpush2.bf16.msra.mxu0 0
        %350 = vmatprep.subr.bf16.mxu0 0
        %351 = vmatpush2.bf16.msra.mxu0 0
        %352 = vmatprep.subr.bf16.mxu0 0
        %353 = vmatpush2.bf16.msra.mxu0 0
        %354 = vmatprep.mubr.bf16.mxu0 0
        %355 = vmatmul.mubr.bf16.gmra.mxu0 %v292
        %v356 = vpop.f32.mrf.mxu0
        %v357 = vadd.f32 0.0, %v356
        %v358 = vpop.f32.mrf.mxu0
        %v359 = vadd.f32 0.0, %v358
        %v360 = vpop.f32.mrf.mxu0
        %v361 = vadd.f32 0.0, %v360
        %v362 = vpop.f32.mrf.mxu0
        %v363 = vadd.f32 0.0, %v362
        %364 = vmatprep.mubr.bf16.mxu0 0
        %365 = vmatmul.mubr.bf16.gmra.mxu0 %v295
        %v366 = vpop.f32.mrf.mxu0
        %v367 = vadd.f32 0.0, %v366
        %v368 = vpop.f32.mrf.mxu0
        %v369 = vadd.f32 0.0, %v368
        %v370 = vpop.f32.mrf.mxu0
        %v371 = vadd.f32 0.0, %v370
        %v372 = vpop.f32.mrf.mxu0
        %v373 = vadd.f32 0.0, %v372
        %374 = vmatprep.mubr.bf16.mxu0 0
        %375 = vmatmul.mubr.bf16.gmra.mxu0 %v298
        %v376 = vpop.f32.mrf.mxu0
        %v377 = vadd.f32 0.0, %v376
        %v378 = vpop.f32.mrf.mxu0
        %v379 = vadd.f32 0.0, %v378
        %v380 = vpop.f32.mrf.mxu0
        %v381 = vadd.f32 0.0, %v380
        %v382 = vpop.f32.mrf.mxu0
        %v383 = vadd.f32 0.0, %v382
        %384 = vmatprep.mubr.bf16.mxu0 0
        %385 = vmatmul.mubr.bf16.gmra.mxu0 %v301
        %v386 = vpop.f32.mrf.mxu0
        %v387 = vadd.f32 0.0, %v386
        %v388 = vpop.f32.mrf.mxu0
        %v389 = vadd.f32 0.0, %v388
        %v390 = vpop.f32.mrf.mxu0
        %v391 = vadd.f32 0.0, %v390
        %v392 = vpop.f32.mrf.mxu0
        %v393 = vadd.f32 0.0, %v392
        %394 = vmatprep.mubr.bf16.mxu0 0
        %395 = vmatmul.mubr.bf16.gmra.mxu0 %v304
        %v396 = vpop.f32.mrf.mxu0
        %v397 = vadd.f32 0.0, %v396
        %v398 = vpop.f32.mrf.mxu0
        %v399 = vadd.f32 0.0, %v398
        %v400 = vpop.f32.mrf.mxu0
        %v401 = vadd.f32 0.0, %v400
        %v402 = vpop.f32.mrf.mxu0
        %v403 = vadd.f32 0.0, %v402
        %404 = vmatprep.mubr.bf16.mxu0 0
        %405 = vmatmul.mubr.bf16.gmra.mxu0 %v307
        %v406 = vpop.f32.mrf.mxu0
        %v407 = vadd.f32 0.0, %v406
        %v408 = vpop.f32.mrf.mxu0
        %v409 = vadd.f32 0.0, %v408
        %v410 = vpop.f32.mrf.mxu0
        %v411 = vadd.f32 0.0, %v410
        %v412 = vpop.f32.mrf.mxu0
        %v413 = vadd.f32 0.0, %v412
        %414 = vmatprep.mubr.bf16.mxu0 0
        %415 = vmatmul.mubr.bf16.gmra.mxu0 %v310
        %v416 = vpop.f32.mrf.mxu0
        %v417 = vadd.f32 0.0, %v416
        %v418 = vpop.f32.mrf.mxu0
        %v419 = vadd.f32 0.0, %v418
        %v420 = vpop.f32.mrf.mxu0
        %v421 = vadd.f32 0.0, %v420
        %v422 = vpop.f32.mrf.mxu0
        %v423 = vadd.f32 0.0, %v422
        %424 = vmatprep.mubr.bf16.mxu0 0
        %425 = vmatmul.mubr.bf16.gmra.mxu0 %v313
        %v426 = vpop.f32.mrf.mxu0
        %v427 = vadd.f32 0.0, %v426
        %v428 = vpop.f32.mrf.mxu0
        %v429 = vadd.f32 0.0, %v428
        %v430 = vpop.f32.mrf.mxu0
        %v431 = vadd.f32 0.0, %v430
        %v432 = vpop.f32.mrf.mxu0
        %v433 = vadd.f32 0.0, %v432
        %434 = vdwg.mxu0
        %v435 = vpack.c.bf16 %v361, %v357
        %v436 = vpack.c.bf16 %v371, %v367
        %v437 = vpack.c.bf16 %v381, %v377
        %v438 = vpack.c.bf16 %v391, %v387
        %v439 = vpack.c.bf16 %v401, %v397
        %v440 = vpack.c.bf16 %v411, %v407
        %v441 = vpack.c.bf16 %v421, %v417
        %v442 = vpack.c.bf16 %v431, %v427
        %v443 = vpack.c.bf16 %v363, %v359
        %v444 = vpack.c.bf16 %v373, %v369
        %v445 = vpack.c.bf16 %v383, %v379
        %v446 = vpack.c.bf16 %v393, %v389
        %v447 = vpack.c.bf16 %v403, %v399
        %v448 = vpack.c.bf16 %v413, %v409
        %v449 = vpack.c.bf16 %v423, %v419
        %v450 = vpack.c.bf16 %v433, %v429
        %v459 = vunpack.c.l.b16 %v435
        %v460 = vunpack.c.h.b16 %v435
        %v461 = vunpack.c.l.b16 %v436
        %v462 = vunpack.c.h.b16 %v436
        %v463 = vunpack.c.l.b16 %v437
        %v464 = vunpack.c.h.b16 %v437
        %v465 = vunpack.c.l.b16 %v438
        %v466 = vunpack.c.h.b16 %v438
        %v467 = vunpack.c.l.b16 %v439
        %v468 = vunpack.c.h.b16 %v439
        %v469 = vunpack.c.l.b16 %v440
        %v470 = vunpack.c.h.b16 %v440
        %v471 = vunpack.c.l.b16 %v441
        %v472 = vunpack.c.h.b16 %v441
        %v473 = vunpack.c.l.b16 %v442
        %v474 = vunpack.c.h.b16 %v442
        %v475 = vpack.c.b16 %v459, %v459
        %v476 = vpack.c.b16 %v460, %v460
        %v477 = vpack.c.b16 %v461, %v461
        %v478 = vpack.c.b16 %v462, %v462
        %v479 = vpack.c.b16 %v463, %v463
        %v480 = vpack.c.b16 %v464, %v464
        %v481 = vpack.c.b16 %v465, %v465
        %v482 = vpack.c.b16 %v466, %v466
        %v483 = vpack.c.b16 %v467, %v467
        %v484 = vpack.c.b16 %v468, %v468
        %v485 = vpack.c.b16 %v469, %v469
        %v486 = vpack.c.b16 %v470, %v470
        %v487 = vpack.c.b16 %v471, %v471
        %v488 = vpack.c.b16 %v472, %v472
        %v489 = vpack.c.b16 %v473, %v473
        %v490 = vpack.c.b16 %v474, %v474
        %507 = vst [vmem:[%s225] sm:$0xf] %v475
        %508 = vst [vmem:[%s225 + $0x4] sm:$0xf] %v476
        %509 = vst [vmem:[%s225 + $0x8] sm:$0xf] %v477
        %510 = vst [vmem:[%s225 + $0xc] sm:$0xf] %v478
        %511 = vst [vmem:[%s225 + $0x10] sm:$0xf] %v479
        %512 = vst [vmem:[%s225 + $0x14] sm:$0xf] %v480
        %513 = vst [vmem:[%s225 + $0x18] sm:$0xf] %v481
        %514 = vst [vmem:[%s225 + $0x1c] sm:$0xf] %v482
        %515 = vst [vmem:[%s225 + $0x20] sm:$0xf] %v483
        %516 = vst [vmem:[%s225 + $0x24] sm:$0xf] %v484
        %517 = vst [vmem:[%s225 + $0x28] sm:$0xf] %v485
        %518 = vst [vmem:[%s225 + $0x2c] sm:$0xf] %v486
        %519 = vst [vmem:[%s225 + $0x30] sm:$0xf] %v487
        %520 = vst [vmem:[%s225 + $0x34] sm:$0xf] %v488
        %521 = vst [vmem:[%s225 + $0x38] sm:$0xf] %v489
        %522 = vst [vmem:[%s225 + $0x3c] sm:$0xf] %v490
        %v531 = vunpack.c.l.b16 %v443
        %v532 = vunpack.c.h.b16 %v443
        %v533 = vunpack.c.l.b16 %v444
        %v534 = vunpack.c.h.b16 %v444
        %v535 = vunpack.c.l.b16 %v445
        %v536 = vunpack.c.h.b16 %v445
        %v537 = vunpack.c.l.b16 %v446
        %v538 = vunpack.c.h.b16 %v446
        %v539 = vunpack.c.l.b16 %v447
        %v540 = vunpack.c.h.b16 %v447
        %v541 = vunpack.c.l.b16 %v448
        %v542 = vunpack.c.h.b16 %v448
        %v543 = vunpack.c.l.b16 %v449
        %v544 = vunpack.c.h.b16 %v449
        %v545 = vunpack.c.l.b16 %v450
        %v546 = vunpack.c.h.b16 %v450
        %v547 = vpack.c.b16 %v531, %v531
        %v548 = vpack.c.b16 %v532, %v532
        %v549 = vpack.c.b16 %v533, %v533
        %v550 = vpack.c.b16 %v534, %v534
        %v551 = vpack.c.b16 %v535, %v535
        %v552 = vpack.c.b16 %v536, %v536
        %v553 = vpack.c.b16 %v537, %v537
        %v554 = vpack.c.b16 %v538, %v538
        %v555 = vpack.c.b16 %v539, %v539
        %v556 = vpack.c.b16 %v540, %v540
        %v557 = vpack.c.b16 %v541, %v541
        %v558 = vpack.c.b16 %v542, %v542
        %v559 = vpack.c.b16 %v543, %v543
        %v560 = vpack.c.b16 %v544, %v544
        %v561 = vpack.c.b16 %v545, %v545
        %v562 = vpack.c.b16 %v546, %v546
        %579 = vst [vmem:[%s232] sm:$0xf] %v547
        %580 = vst [vmem:[%s232 + $0x4] sm:$0xf] %v548
        %581 = vst [vmem:[%s232 + $0x8] sm:$0xf] %v549
        %582 = vst [vmem:[%s232 + $0xc] sm:$0xf] %v550
        %583 = vst [vmem:[%s232 + $0x10] sm:$0xf] %v551
        %584 = vst [vmem:[%s232 + $0x14] sm:$0xf] %v552
        %585 = vst [vmem:[%s232 + $0x18] sm:$0xf] %v553
        %586 = vst [vmem:[%s232 + $0x1c] sm:$0xf] %v554
        %587 = vst [vmem:[%s232 + $0x20] sm:$0xf] %v555
        %588 = vst [vmem:[%s232 + $0x24] sm:$0xf] %v556
        %589 = vst [vmem:[%s232 + $0x28] sm:$0xf] %v557
        %590 = vst [vmem:[%s232 + $0x2c] sm:$0xf] %v558
        %591 = vst [vmem:[%s232 + $0x30] sm:$0xf] %v559
        %592 = vst [vmem:[%s232 + $0x34] sm:$0xf] %v560
        %593 = vst [vmem:[%s232 + $0x38] sm:$0xf] %v561
        %594 = vst [vmem:[%s232 + $0x3c] sm:$0xf] %v562
        %v595 = vunpack.c.l.bf16 %v435
        %v596 = vunpack.c.h.bf16 %v435
        %v597 = vunpack.c.l.bf16 %v436
        %v598 = vunpack.c.h.bf16 %v436
        %v599 = vunpack.c.l.bf16 %v437
        %v600 = vunpack.c.h.bf16 %v437
        %v601 = vunpack.c.l.bf16 %v438
        %v602 = vunpack.c.h.bf16 %v438
        %v603 = vunpack.c.l.bf16 %v439
        %v604 = vunpack.c.h.bf16 %v439
        %v605 = vunpack.c.l.bf16 %v440
        %v606 = vunpack.c.h.bf16 %v440
        %v607 = vunpack.c.l.bf16 %v441
        %v608 = vunpack.c.h.bf16 %v441
        %v609 = vunpack.c.l.bf16 %v442
        %v610 = vunpack.c.h.bf16 %v442
        %v611 = vadd.f32 %v595, %v596
        %v612 = vadd.f32 %v611, %v597
        %v613 = vadd.f32 %v612, %v598
        %v614 = vadd.f32 %v613, %v599
        %v615 = vadd.f32 %v614, %v600
        %v616 = vadd.f32 %v615, %v601
        %v617 = vadd.f32 %v616, %v602
        %v618 = vadd.f32 %v617, %v603
        %v619 = vadd.f32 %v618, %v604
        %v620 = vadd.f32 %v619, %v605
        %v621 = vadd.f32 %v620, %v606
        %v622 = vadd.f32 %v621, %v607
        %v623 = vadd.f32 %v622, %v608
        %v624 = vadd.f32 %v623, %v609
        %v625 = vadd.f32 %v624, %v610
        %v626 = vrot.slane %v625, 4
        %v627 = vadd.f32 %v625, %v626
        %v628 = vrot.slane %v627, 2
        %v629 = vadd.f32 %v627, %v628
        %v630 = vrot.slane %v629, 1
        %v631 = vadd.f32 %v629, %v630
        %v632 = vmul.f32 %v631, 0.0078125
        %v633 = vsub.f32 %v595, %v632
        %v634 = vsub.f32 %v596, %v632
        %v635 = vsub.f32 %v597, %v632
        %v636 = vsub.f32 %v598, %v632
        %v637 = vsub.f32 %v599, %v632
        %v638 = vsub.f32 %v600, %v632
        %v639 = vsub.f32 %v601, %v632
        %v640 = vsub.f32 %v602, %v632
        %v641 = vsub.f32 %v603, %v632
        %v642 = vsub.f32 %v604, %v632
        %v643 = vsub.f32 %v605, %v632
        %v644 = vsub.f32 %v606, %v632
        %v645 = vsub.f32 %v607, %v632
        %v646 = vsub.f32 %v608, %v632
        %v647 = vsub.f32 %v609, %v632
        %v648 = vsub.f32 %v610, %v632
        %v649 = vmul.f32 %v633, %v633
        %v650 = vmul.f32 %v634, %v634
        %v651 = vmul.f32 %v635, %v635
        %v652 = vmul.f32 %v636, %v636
        %v653 = vmul.f32 %v637, %v637
        %v654 = vmul.f32 %v638, %v638
        %v655 = vmul.f32 %v639, %v639
        %v656 = vmul.f32 %v640, %v640
        %v657 = vmul.f32 %v641, %v641
        %v658 = vmul.f32 %v642, %v642
        %v659 = vmul.f32 %v643, %v643
        %v660 = vmul.f32 %v644, %v644
        %v661 = vmul.f32 %v645, %v645
        %v662 = vmul.f32 %v646, %v646
        %v663 = vmul.f32 %v647, %v647
        %v664 = vmul.f32 %v648, %v648
        %v665 = vadd.f32 %v649, %v650
        %v666 = vadd.f32 %v665, %v651
        %v667 = vadd.f32 %v666, %v652
        %v668 = vadd.f32 %v667, %v653
        %v669 = vadd.f32 %v668, %v654
        %v670 = vadd.f32 %v669, %v655
        %v671 = vadd.f32 %v670, %v656
        %v672 = vadd.f32 %v671, %v657
        %v673 = vadd.f32 %v672, %v658
        %v674 = vadd.f32 %v673, %v659
        %v675 = vadd.f32 %v674, %v660
        %v676 = vadd.f32 %v675, %v661
        %v677 = vadd.f32 %v676, %v662
        %v678 = vadd.f32 %v677, %v663
        %v679 = vadd.f32 %v678, %v664
        %v680 = vrot.slane %v679, 4
        %v681 = vadd.f32 %v679, %v680
        %v682 = vrot.slane %v681, 2
        %v683 = vadd.f32 %v681, %v682
        %v684 = vrot.slane %v683, 1
        %v685 = vadd.f32 %v683, %v684
        %vm686 = vcmask 1040384
        %v687 = vsel %vm686, %v631, %v685
        %688 = vst [vmem:[%s239] sm:$0x3] %v687
        %v689 = vunpack.c.l.bf16 %v443
        %v690 = vunpack.c.h.bf16 %v443
        %v691 = vunpack.c.l.bf16 %v444
        %v692 = vunpack.c.h.bf16 %v444
        %v693 = vunpack.c.l.bf16 %v445
        %v694 = vunpack.c.h.bf16 %v445
        %v695 = vunpack.c.l.bf16 %v446
        %v696 = vunpack.c.h.bf16 %v446
        %v697 = vunpack.c.l.bf16 %v447
        %v698 = vunpack.c.h.bf16 %v447
        %v699 = vunpack.c.l.bf16 %v448
        %v700 = vunpack.c.h.bf16 %v448
        %v701 = vunpack.c.l.bf16 %v449
        %v702 = vunpack.c.h.bf16 %v449
        %v703 = vunpack.c.l.bf16 %v450
        %v704 = vunpack.c.h.bf16 %v450
        %v705 = vadd.f32 %v689, %v690
        %v706 = vadd.f32 %v705, %v691
        %v707 = vadd.f32 %v706, %v692
        %v708 = vadd.f32 %v707, %v693
        %v709 = vadd.f32 %v708, %v694
        %v710 = vadd.f32 %v709, %v695
        %v711 = vadd.f32 %v710, %v696
        %v712 = vadd.f32 %v711, %v697
        %v713 = vadd.f32 %v712, %v698
        %v714 = vadd.f32 %v713, %v699
        %v715 = vadd.f32 %v714, %v700
        %v716 = vadd.f32 %v715, %v701
        %v717 = vadd.f32 %v716, %v702
        %v718 = vadd.f32 %v717, %v703
        %v719 = vadd.f32 %v718, %v704
        %v720 = vrot.slane %v719, 4
        %v721 = vadd.f32 %v719, %v720
        %v722 = vrot.slane %v721, 2
        %v723 = vadd.f32 %v721, %v722
        %v724 = vrot.slane %v723, 1
        %v725 = vadd.f32 %v723, %v724
        %v726 = vmul.f32 %v725, 0.0078125
        %v727 = vsub.f32 %v689, %v726
        %v728 = vsub.f32 %v690, %v726
        %v729 = vsub.f32 %v691, %v726
        %v730 = vsub.f32 %v692, %v726
        %v731 = vsub.f32 %v693, %v726
        %v732 = vsub.f32 %v694, %v726
        %v733 = vsub.f32 %v695, %v726
        %v734 = vsub.f32 %v696, %v726
        %v735 = vsub.f32 %v697, %v726
        %v736 = vsub.f32 %v698, %v726
        %v737 = vsub.f32 %v699, %v726
        %v738 = vsub.f32 %v700, %v726
        %v739 = vsub.f32 %v701, %v726
        %v740 = vsub.f32 %v702, %v726
        %v741 = vsub.f32 %v703, %v726
        %v742 = vsub.f32 %v704, %v726
        %v743 = vmul.f32 %v727, %v727
        %v744 = vmul.f32 %v728, %v728
        %v745 = vmul.f32 %v729, %v729
        %v746 = vmul.f32 %v730, %v730
        %v747 = vmul.f32 %v731, %v731
        %v748 = vmul.f32 %v732, %v732
        %v749 = vmul.f32 %v733, %v733
        %v750 = vmul.f32 %v734, %v734
        %v751 = vmul.f32 %v735, %v735
        %v752 = vmul.f32 %v736, %v736
        %v753 = vmul.f32 %v737, %v737
        %v754 = vmul.f32 %v738, %v738
        %v755 = vmul.f32 %v739, %v739
        %v756 = vmul.f32 %v740, %v740
        %v757 = vmul.f32 %v741, %v741
        %v758 = vmul.f32 %v742, %v742
        %v759 = vadd.f32 %v743, %v744
        %v760 = vadd.f32 %v759, %v745
        %v761 = vadd.f32 %v760, %v746
        %v762 = vadd.f32 %v761, %v747
        %v763 = vadd.f32 %v762, %v748
        %v764 = vadd.f32 %v763, %v749
        %v765 = vadd.f32 %v764, %v750
        %v766 = vadd.f32 %v765, %v751
        %v767 = vadd.f32 %v766, %v752
        %v768 = vadd.f32 %v767, %v753
        %v769 = vadd.f32 %v768, %v754
        %v770 = vadd.f32 %v769, %v755
        %v771 = vadd.f32 %v770, %v756
        %v772 = vadd.f32 %v771, %v757
        %v773 = vadd.f32 %v772, %v758
        %v774 = vrot.slane %v773, 4
        %v775 = vadd.f32 %v773, %v774
        %v776 = vrot.slane %v775, 2
        %v777 = vadd.f32 %v775, %v776
        %v778 = vrot.slane %v777, 1
        %v779 = vadd.f32 %v777, %v778
        %v780 = vsel %vm686, %v725, %v779
        %781 = vst [vmem:[%s246] sm:$0x3] %v780
        %s782 = sand.u32 %s81, 1
        %s783 = scalar_lea.sflag [#allocation3], %s782
        %s784 = sand.u32 %s81, 1
        %s785 = smul.addr %s784, 64
        %s786 = scalar_lea.vmem [#allocation2], %s785
        %s787 = sand.u32 %s26, 1
        %s788 = scalar_lea.sflag [#allocation5], %s787
        %s789 = sand.u32 %s107, 1
        %s790 = smul.addr %s789, 64
        %s791 = scalar_lea.vmem [#allocation4], %s790
        %s792 = sand.u32 %s26, 1
        %s793 = scalar_lea.sflag [#allocation5], %s792
        %s794 = sand.u32 %s133, 1
        %s795 = smul.addr %s794, 2
        %s796 = scalar_lea.vmem [#allocation6], %s795
        %s797 = sand.u32 %s159, 1
        %s798 = scalar_lea.sflag [#allocation8], %s797
        %s799 = sand.u32 %s159, 1
        %s800 = smul.addr %s799, 2
        %s801 = scalar_lea.vmem [#allocation7], %s800
        // Predicated region
        $region29: #{tpu_custom_call.1} parent=27 // pred_check
          %p802 = pneg %p91
        $region30: #{tpu_custom_call.1} parent=27 // pred_check_branch
          %804 = sbr.rel (%p802) target = $region32
        $region31: #{tpu_custom_call.1} parent=27 // pred_region
          %s805 = smul.u32 16, %s26
          %s807 = ssub.s32 1024, 1024
          %808 = vsyncadd %s783, %s807
          %s809 = smul.addr %s805, 64
          %s810 = scalar_lea.hbm %s2, %s809
          %s811 = sshll.u32 %s786, 4
          %s812 = int_to_ptr.vmem [resolvable:$true] %s811
          %817 = dma.vmem_to_hbm [thread:$0]  %s812, 1024, %s810, %s783, 64, 64, 4
        $region32: #{tpu_custom_call.1} parent=27 // pred_fallthru
          _
        // Predicated region
        $region33: #{tpu_custom_call.1} parent=27 // pred_check
          %p818 = pneg %p117
        $region34: #{tpu_custom_call.1} parent=27 // pred_check_branch
          %820 = sbr.rel (%p818) target = $region36
        $region35: #{tpu_custom_call.1} parent=27 // pred_region
          %s821 = smul.u32 16, %s26
          %s823 = ssub.s32 1024, 1024
          %824 = vsyncadd %s788, %s823
          %s825 = smul.addr %s821, 64
          %s826 = scalar_lea.hbm %s3, %s825
          %s827 = sshll.u32 %s791, 4
          %s828 = int_to_ptr.vmem [resolvable:$true] %s827
          %833 = dma.vmem_to_hbm [thread:$0]  %s828, 1024, %s826, %s788, 64, 64, 4
        $region36: #{tpu_custom_call.1} parent=27 // pred_fallthru
          _
        // Predicated region
        $region37: #{tpu_custom_call.1} parent=27 // pred_check
          %p834 = pneg %p143
        $region38: #{tpu_custom_call.1} parent=27 // pred_check_branch
          %836 = sbr.rel (%p834) target = $region40
        $region39: #{tpu_custom_call.1} parent=27 // pred_region
          %s838 = ssub.s32 32, 32
          %839 = vsyncadd %s793, %s838
          %s840 = smul.addr %s26, 32
          %s841 = scalar_lea.hbm %s4, %s840
          %s843 = sshll.u32 %s796, 4
          %s844 = int_to_ptr.vmem [resolvable:$true] %s843
          %846 = dma.vmem_to_hbm [thread:$0]  %s844, 32, %s841, %s793
        $region40: #{tpu_custom_call.1} parent=27 // pred_fallthru
          _
        // Predicated region
        $region41: #{tpu_custom_call.1} parent=27 // pred_check
          %p847 = pneg %p169
        $region42: #{tpu_custom_call.1} parent=27 // pred_check_branch
          %849 = sbr.rel (%p847) target = $region44
        $region43: #{tpu_custom_call.1} parent=27 // pred_region
          %s851 = ssub.s32 32, 32
          %852 = vsyncadd %s798, %s851
          %s853 = smul.addr %s26, 32
          %s854 = scalar_lea.hbm %s5, %s853
          %s856 = sshll.u32 %s801, 4
          %s857 = int_to_ptr.vmem [resolvable:$true] %s856
          %859 = dma.vmem_to_hbm [thread:$0]  %s857, 32, %s854, %s798
        $region44: #{tpu_custom_call.1} parent=27 // pred_fallthru
          _
      $region28: #{tpu_custom_call.1} parent=5 // pred_fallthru
        _
      %p860 = scmp.le.s32.totalorder 2, %s21
      // Predicated region
      $region45: #{tpu_custom_call.1} parent=5 // pred_check
        %p861 = pneg %p860
      $region46: #{tpu_custom_call.1} parent=5 // pred_check_branch
        %863 = sbr.rel (%p861) target = $region48
      $region47: #{tpu_custom_call.1} parent=5 // pred_region
        %s864 = ssub.s32 %s21, 2
        // Predicated region
        $region49: #{tpu_custom_call.1} parent=47 // pred_check
          %p865 = pneg %p97
        $region50: #{tpu_custom_call.1} parent=47 // pred_check_branch
          %867 = sbr.rel (%p865) target = $region52
        $region51: #{tpu_custom_call.1} parent=47 // pred_region
          %s868 = sand.u32 %s82, 1
          %s869 = scalar_lea.sflag [#allocation3], %s868
          %s870 = sand.u32 %s82, 1
          %s871 = smul.addr %s870, 64
          %s872 = scalar_lea.vmem [#allocation2], %s871
          %873 = dma.done %s869, 1024
        $region52: #{tpu_custom_call.1} parent=47 // pred_fallthru
          _
        // Predicated region
        $region53: #{tpu_custom_call.1} parent=47 // pred_check
          %p874 = pneg %p123
        $region54: #{tpu_custom_call.1} parent=47 // pred_check_branch
          %876 = sbr.rel (%p874) target = $region56
        $region55: #{tpu_custom_call.1} parent=47 // pred_region
          %s877 = sand.u32 %s27, 1
          %s878 = scalar_lea.sflag [#allocation5], %s877
          %s879 = sand.u32 %s108, 1
          %s880 = smul.addr %s879, 64
          %s881 = scalar_lea.vmem [#allocation4], %s880
          %882 = dma.done %s878, 1024
        $region56: #{tpu_custom_call.1} parent=47 // pred_fallthru
          _
        // Predicated region
        $region57: #{tpu_custom_call.1} parent=47 // pred_check
          %p883 = pneg %p149
        $region58: #{tpu_custom_call.1} parent=47 // pred_check_branch
          %885 = sbr.rel (%p883) target = $region60
        $region59: #{tpu_custom_call.1} parent=47 // pred_region
          %s886 = sand.u32 %s27, 1
          %s887 = scalar_lea.sflag [#allocation5], %s886
          %s888 = sand.u32 %s134, 1
          %s889 = smul.addr %s888, 2
          %s890 = scalar_lea.vmem [#allocation6], %s889
          %891 = dma.done %s887, 32
        $region60: #{tpu_custom_call.1} parent=47 // pred_fallthru
          _
        // Predicated region
        $region61: #{tpu_custom_call.1} parent=47 // pred_check
          %p892 = pneg %p175
        $region62: #{tpu_custom_call.1} parent=47 // pred_check_branch
          %894 = sbr.rel (%p892) target = $region64
        $region63: #{tpu_custom_call.1} parent=47 // pred_region
          %s895 = sand.u32 %s160, 1
          %s896 = scalar_lea.sflag [#allocation8], %s895
          %s897 = sand.u32 %s160, 1
          %s898 = smul.addr %s897, 2
          %s899 = scalar_lea.vmem [#allocation7], %s898
          %900 = dma.done %s896, 32
        $region64: #{tpu_custom_call.1} parent=47 // pred_fallthru
          _
      $region48: #{tpu_custom_call.1} parent=5 // pred_fallthru
        _
    $region6: #{tpu_custom_call.1} parent=1 // loop_footer
      %s25 = sadd.s32 1, %s21
    $region7: #{tpu_custom_call.1} parent=1 // loop_footer_branch
      %20 = sbr.rel target = $region3
    $region8: #{tpu_custom_call.1} parent=1 // loop_exit
      _
    %901 = vsyncpa [#allocation3], 1
    %s902 = scalar_lea.sflag [#allocation3], 1
    %903 = vsyncpa %s902, 1
    %904 = vsyncpa [#allocation5], 1
    %s905 = scalar_lea.sflag [#allocation5], 1
    %906 = vsyncpa %s905, 1
    %907 = vsyncpa [#allocation8], 1
    %s908 = scalar_lea.sflag [#allocation8], 1
    %909 = vsyncpa %s908, 1

</llo_original>
